<compile_context>
chip_gen: v7x
topology: tpu7x:2x2x1
jax: 0.10.0
libtpu: 0.0.40
codegen_flags: <defaults>
</compile_context>

<pallas_src>
import math
import functools

import jax
import jax.numpy as jnp
import numpy as np
from jax.experimental import pallas as pl
from jax.experimental.pallas import tpu as pltpu


def _round_up(v, m):
    return ((v + m - 1) // m) * m


def _self_attn_kernel(x_ref, w_qkv_ref, b_qkv_ref, r_seg_ref, e_p_ref,
                      g_out_ref, r_den_ref, w_o_ref, b_o_ref, o_ref, *, lanes):
    """Fused SelfAttn over one tile of flattened tokens.

    x_ref     : (tn, C)  f32     token tile
    w_qkv_ref : (C, 3L)  bf16    fused, pre-expanded/scaled Q|K|V projection
    b_qkv_ref : (1, 3L)  f32
    r_seg_ref : (L, H*H) bf16    0/1: per (query-head, key-head) segment sum over D
    e_p_ref   : (H*H, L) bf16    0/1: expand probabilities to per-element lanes
    g_out_ref : (L, C)   bf16    0/1: gather sum_t p[h,t]*v[t,d] -> (h,d)
    r_den_ref : (H*H, C) bf16    0/1: r_grp @ e_inv, denom sum + per-head broadcast
    w_o_ref   : (C, C)   bf16, b_o_ref: (1, C) f32   output projection
    """
    f32 = jnp.float32
    bf16 = jnp.bfloat16

    # Fused Q/K/V projection: bf16 operands, f32 accumulation (single MXU matmul).
    x = x_ref[...].astype(bf16)
    qkv = jnp.dot(x, w_qkv_ref[...], preferred_element_type=f32)     # (tn, 3L)
    qkv = qkv + b_qkv_ref[...]
    q_big = qkv[:, 0 * lanes:1 * lanes]                              # (tn, L)
    k_big = qkv[:, 1 * lanes:2 * lanes]
    v_big = qkv[:, 2 * lanes:3 * lanes]

    # scores[n, h*H + t] = scale * <q[n,h,:], k[n,t,:]>  (segment sum on the MXU;
    # the 1/sqrt(D) scale is folded into the Q projection columns).
    qk = (q_big * k_big).astype(bf16)
    s = jnp.dot(qk, r_seg_ref[...], preferred_element_type=f32)      # (tn, H*H)

    # Softmax over the key-head axis inside each group of H lanes.  Subtracting
    # the ROW max is mathematically identical to the per-group max; the only
    # cross-lane (XLU) op in the kernel.  The epsilon clamp below guards the
    # extreme case where one group's scores underflow entirely (score spread
    # > ~88), in which case that head's output degrades to 0 instead of NaN.
    m = jnp.max(s, axis=-1, keepdims=True)
    p = jnp.exp(s - m)                                               # f32
    p_bf = p.astype(bf16)

    # Denominator, already broadcast across each head's D output lanes
    # (r_den = r_grp @ e_inv precomposed wrapper-side).  Exact reciprocal.
    denom = jnp.dot(p_bf, r_den_ref[...], preferred_element_type=f32)  # (tn, C)
    inv = pl.reciprocal(jnp.maximum(denom, 1e-30))

    # Numerator: out[n, h*D + d] = sum_t p[n,h,t] * v[n,t,d]
    p_big = jnp.dot(p_bf, e_p_ref[...], preferred_element_type=f32)  # (tn, L)
    pv = (p_big * v_big).astype(bf16)
    o_un = jnp.dot(pv, g_out_ref[...], preferred_element_type=f32)   # (tn, C)

    attn = (o_un * inv).astype(bf16)
    out = jnp.dot(attn, w_o_ref[...], preferred_element_type=f32)
    out = out + b_o_ref[...]
    o_ref[...] = out.astype(o_ref.dtype)


def self_attn_pallas(x, params, num_heads, *, tile_n=2048):
    """x: (B, S, C) float32; params: torch-layout Linear weights/biases."""
    B, S, C = x.shape
    H = num_heads
    D = C // H
    G = H * H
    L = G * D                      # lane width of expanded Q/K/V (= H*C)
    scale = 1.0 / math.sqrt(D)
    N = B * S
    f32 = jnp.float32
    bf16 = jnp.bfloat16

    # ---- Static 0/1 indicator matrices (exact in bf16). ----------------------
    eye_d = np.eye(D, dtype=np.float32)
    a_q = np.kron(np.eye(H, dtype=np.float32), np.tile(eye_d, (1, H)))          # (C, L)
    r_seg = np.kron(np.eye(G, dtype=np.float32), np.ones((D, 1), np.float32))   # (L, G)
    r_grp = np.kron(np.eye(H, dtype=np.float32), np.ones((H, 1), np.float32))   # (G, H)
    e_p = np.kron(np.eye(G, dtype=np.float32), np.ones((1, D), np.float32))     # (G, L)
    g_out = np.kron(np.eye(H, dtype=np.float32), np.tile(eye_d, (H, 1)))        # (L, C)
    e_inv = np.kron(np.eye(H, dtype=np.float32), np.ones((1, D), np.float32))   # (H, C)
    r_den = r_grp @ e_inv                                                       # (G, C), 0/1

    # ---- Fold per-head expand/tile layouts (and the scale) into the weights. --
    wq_t = params["wq"].T.astype(f32)
    wk_t = params["wk"].T.astype(f32)
    wv_t = params["wv"].T.astype(f32)
    bq = params["bq"].reshape(1, C).astype(f32)
    bk = params["bk"].reshape(1, C).astype(f32)
    bv = params["bv"].reshape(1, C).astype(f32)

    a_q_j = jnp.asarray(a_q)
    w_q_big = (wq_t @ a_q_j) * scale            # (C, L) scaled + head-expanded queries
    b_q_big = (bq @ a_q_j) * scale              # (1, L)
    w_k_big = jnp.tile(wk_t, (1, H))            # (C, L) keys tiled per query head
    b_k_big = jnp.tile(bk, (1, H))
    w_v_big = jnp.tile(wv_t, (1, H))            # (C, L)
    b_v_big = jnp.tile(bv, (1, H))

    w_qkv = jnp.concatenate([w_q_big, w_k_big, w_v_big], axis=1).astype(bf16)   # (C, 3L)
    b_qkv = jnp.concatenate([b_q_big, b_k_big, b_v_big], axis=1).astype(f32)    # (1, 3L)

    w_o = params["wo"].T.astype(bf16)
    b_o = params["bo"].reshape(1, C).astype(f32)

    # ---- Flatten tokens and tile rows (parallel grid axis). ------------------
    x2 = x.reshape(N, C)
    tn = min(tile_n, _round_up(N, 8))           # sublane-aligned row tile
    n_pad = _round_up(N, tn)
    if n_pad != N:
        x2 = jnp.pad(x2, ((0, n_pad - N), (0, 0)))
    n_tiles = n_pad // tn

    kernel = functools.partial(_self_attn_kernel, lanes=L)

    def const(shape):
        return pl.BlockSpec(shape, lambda i: (0,) * len(shape))

    grid_spec = pltpu.PrefetchScalarGridSpec(
        num_scalar_prefetch=0,
        grid=(n_tiles,),
        in_specs=[
            pl.BlockSpec((tn, C), lambda i: (i, 0)),   # x tile
            const((C, 3 * L)),                         # w_qkv   (resident)
            const((1, 3 * L)),                         # b_qkv
            const((L, G)),                             # r_seg
            const((G, L)),                             # e_p
            const((L, C)),                             # g_out
            const((G, C)),                             # r_den
            const((C, C)),                             # w_o
            const((1, C)),                             # b_o
        ],
        out_specs=pl.BlockSpec((tn, C), lambda i: (i, 0)),
    )

    out2 = pl.pallas_call(
        kernel,
        out_shape=jax.ShapeDtypeStruct((n_pad, C), x.dtype),
        grid_spec=grid_spec,
        compiler_params=pltpu.CompilerParams(
            dimension_semantics=("parallel",)),
    )(x2, w_qkv, b_qkv,
      jnp.asarray(r_seg, bf16), jnp.asarray(e_p, bf16),
      jnp.asarray(g_out, bf16), jnp.asarray(r_den, bf16), w_o, b_o)

    if n_pad != N:
        out2 = out2[:N]
    return out2.reshape(B, S, C)


def self_attn_reference(x, params, num_heads):
    """Pure-JAX f32 reference reproducing the PyTorch forward exactly."""
    B, S, C = x.shape
    D = C // num_heads
    scale = 1.0 / math.sqrt(D)

    def linear(z, w, b):
        return z @ w.T + b

    q = linear(x, params["wq"], params["bq"]).reshape(B, S, num_heads, D)
    k = linear(x, params["wk"], params["bk"]).reshape(B, S, num_heads, D)
    v = linear(x, params["wv"], params["bv"]).reshape(B, S, num_heads, D)

    # SDPA on (B, S, H, D): attention over the H axis (last-two dims = (H, D)).
    s = jnp.einsum("bshd,bstd->bsht", q, k) * scale
    p = jax.nn.softmax(s, axis=-1)
    o = jnp.einsum("bsht,bstd->bshd", p, v).reshape(B, S, C)
    return linear(o, params["wo"], params["bo"])


def make_params(key, in_dim):
    bound = 1.0 / math.sqrt(in_dim)
    names = ["wq", "bq", "wk", "bk", "wv", "bv", "wo", "bo"]
    shapes = [(in_dim, in_dim), (in_dim,)] * 4
    keys = jax.random.split(key, len(names))
    return {
        n: jax.random.uniform(k, s, jnp.float32, minval=-bound, maxval=bound)
        for n, s, k in zip(names, shapes, keys)
    }


if __name__ == "__main__":
    B, S, C, H = 2, 8, 32, 4   # batch, seq, in_dim, num_heads
    key = jax.random.PRNGKey(0)
    kx, kp = jax.random.split(key)
    x = jax.random.normal(kx, (B, S, C), jnp.float32)
    params = make_params(kp, C)

    out = self_attn_pallas(x, params, H)
    out = jax.block_until_ready(out)

    ref = self_attn_reference(x, params, H)
    # Tolerance reflects the bf16 quantization of x / weights (f32 accumulation
    # throughout); measured error is ~1e-3 - 1e-2 at these magnitudes.
    assert np.allclose(np.asarray(out), np.asarray(ref), atol=2e-2, rtol=2e-2), \
        "Pallas output mismatch vs reference"
    print("KERNEL_OK")
</pallas_src>

<mosaic_0001>
module attributes {stable_mosaic.version = 11 : i64} {
  func.func @_self_attn_kernel(%arg0: i32, %arg1: memref<16x32xf32, #tpu.memory_space<vmem>>, %arg2: memref<32x384xbf16, #tpu.memory_space<vmem>>, %arg3: memref<1x384xf32, #tpu.memory_space<vmem>>, %arg4: memref<128x16xbf16, #tpu.memory_space<vmem>>, %arg5: memref<16x128xbf16, #tpu.memory_space<vmem>>, %arg6: memref<128x32xbf16, #tpu.memory_space<vmem>>, %arg7: memref<16x32xbf16, #tpu.memory_space<vmem>>, %arg8: memref<32x32xbf16, #tpu.memory_space<vmem>>, %arg9: memref<1x32xf32, #tpu.memory_space<vmem>>, %arg10: memref<16x32xf32, #tpu.memory_space<vmem>>) attributes {dimension_semantics = [#tpu.dimension_semantics<parallel>], iteration_bounds = array<i64: 1>, scalar_prefetch = 0 : i64, scratch_operands = 0 : i64, tpu.core_type = #tpu.core_type<tc>, window_params = [{transform_indices = @transform_0, window_bounds = array<i64: 16, 32>}, {pipeline_mode = #tpu.pipeline_mode<synchronous>, transform_indices = @transform_1, window_bounds = array<i64: 32, 384>}, {pipeline_mode = #tpu.pipeline_mode<synchronous>, transform_indices = @transform_2, window_bounds = array<i64: 1, 384>}, {pipeline_mode = #tpu.pipeline_mode<synchronous>, transform_indices = @transform_3, window_bounds = array<i64: 128, 16>}, {pipeline_mode = #tpu.pipeline_mode<synchronous>, transform_indices = @transform_4, window_bounds = array<i64: 16, 128>}, {pipeline_mode = #tpu.pipeline_mode<synchronous>, transform_indices = @transform_5, window_bounds = array<i64: 128, 32>}, {pipeline_mode = #tpu.pipeline_mode<synchronous>, transform_indices = @transform_6, window_bounds = array<i64: 16, 32>}, {pipeline_mode = #tpu.pipeline_mode<synchronous>, transform_indices = @transform_7, window_bounds = array<i64: 32, 32>}, {pipeline_mode = #tpu.pipeline_mode<synchronous>, transform_indices = @transform_8, window_bounds = array<i64: 1, 32>}, {transform_indices = @transform_9, window_bounds = array<i64: 16, 32>}]} {
    %c0 = arith.constant 0 : index
    %c0_0 = arith.constant 0 : index
    %0 = vector.load %arg1[%c0, %c0_0] : memref<16x32xf32, #tpu.memory_space<vmem>>, vector<16x32xf32>
    %1 = arith.truncf %0 : vector<16x32xf32> to vector<16x32xbf16>
    %c0_1 = arith.constant 0 : index
    %c0_2 = arith.constant 0 : index
    %2 = vector.load %arg2[%c0_1, %c0_2] : memref<32x384xbf16, #tpu.memory_space<vmem>>, vector<32x384xbf16>
    %cst = arith.constant dense<0.000000e+00> : vector<16x384xf32>
    %3 = tpu.matmul %1, %2, %cst {dimension_numbers = #tpu.dot_dimension_numbers<[1], [0], [0], [1], [0, 0, 1, 1], [], []>} : vector<16x32xbf16>, vector<32x384xbf16>, vector<16x384xf32> -> vector<16x384xf32>
    %c0_3 = arith.constant 0 : index
    %c0_4 = arith.constant 0 : index
    %4 = vector.load %arg3[%c0_3, %c0_4] : memref<1x384xf32, #tpu.memory_space<vmem>>, vector<1x384xf32>
    %5 = vector.broadcast %4 : vector<1x384xf32> to vector<16x384xf32>
    %6 = arith.addf %3, %5 : vector<16x384xf32>
    %7 = vector.extract_strided_slice %6 {offsets = [0, 0], sizes = [16, 128], strides = [1, 1]} : vector<16x384xf32> to vector<16x128xf32>
    %8 = vector.extract_strided_slice %6 {offsets = [0, 128], sizes = [16, 128], strides = [1, 1]} : vector<16x384xf32> to vector<16x128xf32>
    %9 = vector.extract_strided_slice %6 {offsets = [0, 256], sizes = [16, 128], strides = [1, 1]} : vector<16x384xf32> to vector<16x128xf32>
    %10 = arith.mulf %7, %8 : vector<16x128xf32>
    %11 = arith.truncf %10 : vector<16x128xf32> to vector<16x128xbf16>
    %c0_5 = arith.constant 0 : index
    %c0_6 = arith.constant 0 : index
    %12 = vector.load %arg4[%c0_5, %c0_6] : memref<128x16xbf16, #tpu.memory_space<vmem>>, vector<128x16xbf16>
    %cst_7 = arith.constant dense<0.000000e+00> : vector<16x16xf32>
    %13 = tpu.matmul %11, %12, %cst_7 {dimension_numbers = #tpu.dot_dimension_numbers<[1], [0], [0], [1], [0, 0, 1, 1], [], []>} : vector<16x128xbf16>, vector<128x16xbf16>, vector<16x16xf32> -> vector<16x16xf32>
    %cst_8 = arith.constant dense<0xFF800000> : vector<16xf32>
    %14 = vector.multi_reduction <maximumf>, %13, %cst_8 [1] : vector<16x16xf32> to vector<16xf32>
    %15 = vector.shape_cast %14 : vector<16xf32> to vector<16x1xf32>
    %16 = vector.broadcast %15 : vector<16x1xf32> to vector<16x16xf32>
    %17 = arith.subf %13, %16 : vector<16x16xf32>
    %18 = math.exp %17 : vector<16x16xf32>
    %19 = arith.truncf %18 : vector<16x16xf32> to vector<16x16xbf16>
    %c0_9 = arith.constant 0 : index
    %c0_10 = arith.constant 0 : index
    %20 = vector.load %arg7[%c0_9, %c0_10] : memref<16x32xbf16, #tpu.memory_space<vmem>>, vector<16x32xbf16>
    %cst_11 = arith.constant dense<0.000000e+00> : vector<16x32xf32>
    %21 = tpu.matmul %19, %20, %cst_11 {dimension_numbers = #tpu.dot_dimension_numbers<[1], [0], [0], [1], [0, 0, 1, 1], [], []>} : vector<16x16xbf16>, vector<16x32xbf16>, vector<16x32xf32> -> vector<16x32xf32>
    %cst_12 = arith.constant 1.000000e-30 : f32
    %22 = vector.broadcast %cst_12 : f32 to vector<16x32xf32>
    %23 = arith.maximumf %21, %22 : vector<16x32xf32>
    %24 = tpu.reciprocal %23 : vector<16x32xf32> -> vector<16x32xf32>
    %c0_13 = arith.constant 0 : index
    %c0_14 = arith.constant 0 : index
    %25 = vector.load %arg5[%c0_13, %c0_14] : memref<16x128xbf16, #tpu.memory_space<vmem>>, vector<16x128xbf16>
    %cst_15 = arith.constant dense<0.000000e+00> : vector<16x128xf32>
    %26 = tpu.matmul %19, %25, %cst_15 {dimension_numbers = #tpu.dot_dimension_numbers<[1], [0], [0], [1], [0, 0, 1, 1], [], []>} : vector<16x16xbf16>, vector<16x128xbf16>, vector<16x128xf32> -> vector<16x128xf32>
    %27 = arith.mulf %26, %9 : vector<16x128xf32>
    %28 = arith.truncf %27 : vector<16x128xf32> to vector<16x128xbf16>
    %c0_16 = arith.constant 0 : index
    %c0_17 = arith.constant 0 : index
    %29 = vector.load %arg6[%c0_16, %c0_17] : memref<128x32xbf16, #tpu.memory_space<vmem>>, vector<128x32xbf16>
    %cst_18 = arith.constant dense<0.000000e+00> : vector<16x32xf32>
    %30 = tpu.matmul %28, %29, %cst_18 {dimension_numbers = #tpu.dot_dimension_numbers<[1], [0], [0], [1], [0, 0, 1, 1], [], []>} : vector<16x128xbf16>, vector<128x32xbf16>, vector<16x32xf32> -> vector<16x32xf32>
    %31 = arith.mulf %30, %24 : vector<16x32xf32>
    %32 = arith.truncf %31 : vector<16x32xf32> to vector<16x32xbf16>
    %c0_19 = arith.constant 0 : index
    %c0_20 = arith.constant 0 : index
    %33 = vector.load %arg8[%c0_19, %c0_20] : memref<32x32xbf16, #tpu.memory_space<vmem>>, vector<32x32xbf16>
    %cst_21 = arith.constant dense<0.000000e+00> : vector<16x32xf32>
    %34 = tpu.matmul %32, %33, %cst_21 {dimension_numbers = #tpu.dot_dimension_numbers<[1], [0], [0], [1], [0, 0, 1, 1], [], []>} : vector<16x32xbf16>, vector<32x32xbf16>, vector<16x32xf32> -> vector<16x32xf32>
    %c0_22 = arith.constant 0 : index
    %c0_23 = arith.constant 0 : index
    %35 = vector.load %arg9[%c0_22, %c0_23] : memref<1x32xf32, #tpu.memory_space<vmem>>, vector<1x32xf32>
    %36 = vector.broadcast %35 : vector<1x32xf32> to vector<16x32xf32>
    %37 = arith.addf %34, %36 : vector<16x32xf32>
    %c0_24 = arith.constant 0 : index
    %c0_25 = arith.constant 0 : index
    %38 = vector.load %arg10[%c0_24, %c0_25] : memref<16x32xf32, #tpu.memory_space<vmem>>, vector<16x32xf32>
    tpu.vector_store %arg10[%c0_24, %c0_25], %37 {strides = array<i32>} : memref<16x32xf32, #tpu.memory_space<vmem>>, vector<16x32xf32>,
    return
  }
  func.func @transform_0(%arg0: i32) -> (i32, i32) {
    %c0_i32 = arith.constant 0 : i32
    %c0_i32_0 = arith.constant 0 : i32
    return %arg0, %c0_i32 : i32, i32
  }
  func.func @transform_1(%arg0: i32) -> (i32, i32) {
    %c0_i32 = arith.constant 0 : i32
    %c0_i32_0 = arith.constant 0 : i32
    %c0_i32_1 = arith.constant 0 : i32
    return %c0_i32, %c0_i32_0 : i32, i32
  }
  func.func @transform_2(%arg0: i32) -> (i32, i32) {
    %c0_i32 = arith.constant 0 : i32
    %c0_i32_0 = arith.constant 0 : i32
    %c0_i32_1 = arith.constant 0 : i32
    return %c0_i32, %c0_i32_0 : i32, i32
  }
  func.func @transform_3(%arg0: i32) -> (i32, i32) {
    %c0_i32 = arith.constant 0 : i32
    %c0_i32_0 = arith.constant 0 : i32
    %c0_i32_1 = arith.constant 0 : i32
    return %c0_i32, %c0_i32_0 : i32, i32
  }
  func.func @transform_4(%arg0: i32) -> (i32, i32) {
    %c0_i32 = arith.constant 0 : i32
    %c0_i32_0 = arith.constant 0 : i32
    %c0_i32_1 = arith.constant 0 : i32
    return %c0_i32, %c0_i32_0 : i32, i32
  }
  func.func @transform_5(%arg0: i32) -> (i32, i32) {
    %c0_i32 = arith.constant 0 : i32
    %c0_i32_0 = arith.constant 0 : i32
    %c0_i32_1 = arith.constant 0 : i32
    return %c0_i32, %c0_i32_0 : i32, i32
  }
  func.func @transform_6(%arg0: i32) -> (i32, i32) {
    %c0_i32 = arith.constant 0 : i32
    %c0_i32_0 = arith.constant 0 : i32
    %c0_i32_1 = arith.constant 0 : i32
    return %c0_i32, %c0_i32_0 : i32, i32
  }
  func.func @transform_7(%arg0: i32) -> (i32, i32) {
    %c0_i32 = arith.constant 0 : i32
    %c0_i32_0 = arith.constant 0 : i32
    %c0_i32_1 = arith.constant 0 : i32
    return %c0_i32, %c0_i32_0 : i32, i32
  }
  func.func @transform_8(%arg0: i32) -> (i32, i32) {
    %c0_i32 = arith.constant 0 : i32
    %c0_i32_0 = arith.constant 0 : i32
    %c0_i32_1 = arith.constant 0 : i32
    return %c0_i32, %c0_i32_0 : i32, i32
  }
  func.func @transform_9(%arg0: i32) -> (i32, i32) {
    %c0_i32 = arith.constant 0 : i32
    %c0_i32_0 = arith.constant 0 : i32
    return %arg0, %c0_i32 : i32, i32
  }
}

</mosaic_0001>

<llo_original>
// kernel: tpu_custom_call.1
$region0: #{tpu_custom_call.1}
  #allocation0 [shape = 'u32[]', space=smem, size = 0x4, offset = 0x4, fixed_abs, tag = 'smem constant byte address 0x4 - core index']
  #allocation1 [shape = 'u32[144,128]{1,0:T(1,128)}', space=vmem, size = 0x12000, scoped, tag = 'internal scratch']
  %s0 = inlined_call_operand.vmem [shape: f32[16,32], index: 0, kind: input, shape index: {}]
  %s1 = inlined_call_operand.vmem [shape: bf16[32,384], index: 1, kind: input, shape index: {}]
  %s2 = inlined_call_operand.vmem [shape: f32[1,384], index: 2, kind: input, shape index: {}]
  %s3 = inlined_call_operand.vmem [shape: bf16[128,16], index: 3, kind: input, shape index: {}]
  %s4 = inlined_call_operand.vmem [shape: bf16[16,128], index: 4, kind: input, shape index: {}]
  %s5 = inlined_call_operand.vmem [shape: bf16[128,32], index: 5, kind: input, shape index: {}]
  %s6 = inlined_call_operand.vmem [shape: bf16[16,32], index: 6, kind: input, shape index: {}]
  %s7 = inlined_call_operand.vmem [shape: bf16[32,32], index: 7, kind: input, shape index: {}]
  %s8 = inlined_call_operand.vmem [shape: f32[1,32], index: 8, kind: input, shape index: {}]
  %s9 = inlined_call_operand.hbm [shape: f32[16,32], index: 9, kind: output, shape index: {}]
  %s10 = sld [smem:[#allocation0]]
  $region46: #{tpu_custom_call.1} parent=0
    _
  %s12 = ssub.s32 1, %s10
  %s13 = scalar_select 0, %s12, %s10
  $region1: #{tpu_custom_call.1} parent=0
    #allocation2 [shape = 'u8[8192]{0}', space=vmem, size = 0x2000, scoped, tag = 'output window, operand 0, single buffered']
    #allocation3 [shape = 's32[1]{0}', space=sflag, size = 0x4, scoped, tag = 'scoped memory for tpu_custom_call.1']
    %14 = vsyncpa [#allocation3], 0
    // Predicated region
    $region2: #{tpu_custom_call.1} parent=1 // pred_check
      _
    $region3: #{tpu_custom_call.1} parent=1 // pred_check_branch
      %16 = sbr.rel (0) target = $region5
    $region4: #{tpu_custom_call.1} parent=1 // pred_region
      _
    $region5: #{tpu_custom_call.1} parent=1 // pred_fallthru
      _
    // Predicated region
    $region6: #{tpu_custom_call.1} parent=1 // pred_check
      _
    $region7: #{tpu_custom_call.1} parent=1 // pred_check_branch
      %18 = sbr.rel (0) target = $region9
    $region8: #{tpu_custom_call.1} parent=1 // pred_region
      _
    $region9: #{tpu_custom_call.1} parent=1 // pred_fallthru
      _
    // Predicated region
    $region10: #{tpu_custom_call.1} parent=1 // pred_check
      _
    $region11: #{tpu_custom_call.1} parent=1 // pred_check_branch
      %20 = sbr.rel (0) target = $region13
    $region12: #{tpu_custom_call.1} parent=1 // pred_region
      _
    $region13: #{tpu_custom_call.1} parent=1 // pred_fallthru
      _
    // Predicated region
    $region14: #{tpu_custom_call.1} parent=1 // pred_check
      _
    $region15: #{tpu_custom_call.1} parent=1 // pred_check_branch
      %22 = sbr.rel (0) target = $region17
    $region16: #{tpu_custom_call.1} parent=1 // pred_region
      _
    $region17: #{tpu_custom_call.1} parent=1 // pred_fallthru
      _
    // Predicated region
    $region18: #{tpu_custom_call.1} parent=1 // pred_check
      _
    $region19: #{tpu_custom_call.1} parent=1 // pred_check_branch
      %24 = sbr.rel (0) target = $region21
    $region20: #{tpu_custom_call.1} parent=1 // pred_region
      _
    $region21: #{tpu_custom_call.1} parent=1 // pred_fallthru
      _
    // Predicated region
    $region22: #{tpu_custom_call.1} parent=1 // pred_check
      _
    $region23: #{tpu_custom_call.1} parent=1 // pred_check_branch
      %26 = sbr.rel (0) target = $region25
    $region24: #{tpu_custom_call.1} parent=1 // pred_region
      _
    $region25: #{tpu_custom_call.1} parent=1 // pred_fallthru
      _
    // Predicated region
    $region26: #{tpu_custom_call.1} parent=1 // pred_check
      _
    $region27: #{tpu_custom_call.1} parent=1 // pred_check_branch
      %28 = sbr.rel (0) target = $region29
    $region28: #{tpu_custom_call.1} parent=1 // pred_region
      _
    $region29: #{tpu_custom_call.1} parent=1 // pred_fallthru
      _
    // Predicated region
    $region30: #{tpu_custom_call.1} parent=1 // pred_check
      _
    $region31: #{tpu_custom_call.1} parent=1 // pred_check_branch
      %30 = sbr.rel (0) target = $region33
    $region32: #{tpu_custom_call.1} parent=1 // pred_region
      _
    $region33: #{tpu_custom_call.1} parent=1 // pred_fallthru
      _
    // Predicated region
    $region34: #{tpu_custom_call.1} parent=1 // pred_check
      _
    $region35: #{tpu_custom_call.1} parent=1 // pred_check_branch
      %32 = sbr.rel (0) target = $region37
    $region36: #{tpu_custom_call.1} parent=1 // pred_region
      _
    $region37: #{tpu_custom_call.1} parent=1 // pred_fallthru
      _
    %v34 = vld [vmem:[%s0] sm:$0xff]
    %v35 = vld [vmem:[%s0 + $0x8] sm:$0xff]
    %v36 = vpack.c.bf16 %v35, %v34
    %v37 = vld [vmem:[%s1] sm:$0xff]
    %v38 = vld [vmem:[%s1 + $0x8] sm:$0xf]
    %v39 = vld [vmem:[%s1 + $0xc] sm:$0xff]
    %v40 = vld [vmem:[%s1 + $0x14] sm:$0xf]
    %v41 = vld [vmem:[%s1 + $0x18] sm:$0xff]
    %v42 = vld [vmem:[%s1 + $0x20] sm:$0xf]
    %v43 = vld [vmem:[%s1 + $0x24] sm:$0xff]
    %v44 = vld [vmem:[%s1 + $0x2c] sm:$0xf]
    %v45 = vld [vmem:[%s2] sm:$0x7]
    %v47 = vlaneseq
    %v48 = vshrl.u32 %v47, 7
    %v49 = vsub.s32 0, %v48
    %v50 = vrot.slane %v45, %v49
    %v51 = vlaneseq
    %v52 = vshrl.u32 %v51, 7
    %v53 = vsub.s32 1, %v52
    %v54 = vrot.slane %v45, %v53
    %v55 = vlaneseq
    %v56 = vshrl.u32 %v55, 7
    %v57 = vsub.s32 2, %v56
    %v58 = vrot.slane %v45, %v57
    %v70 = vunpack.c.l.b16 %v37
    %v71 = vunpack.c.h.b16 %v37
    %v72 = vunpack.c.l.b16 %v38
    %v73 = vunpack.c.l.b16 %v39
    %v74 = vunpack.c.h.b16 %v39
    %v75 = vunpack.c.l.b16 %v40
    %v76 = vunpack.c.l.b16 %v41
    %v77 = vunpack.c.h.b16 %v41
    %v78 = vunpack.c.l.b16 %v42
    %v79 = vunpack.c.l.b16 %v43
    %v80 = vunpack.c.h.b16 %v43
    %v81 = vunpack.c.l.b16 %v44
    %v82 = vpack.c.b16 %v73, %v70
    %v83 = vpack.c.b16 %v74, %v71
    %v84 = vpack.c.b16 %v75, %v72
    %v85 = vpack.c.b16 %v79, %v76
    %v86 = vpack.c.b16 %v80, %v77
    %v87 = vpack.c.b16 %v81, %v78
    %vm94 = vcmask 261120
    %v96 = vsel %vm94, %v36, 0
    %98 = vmatprep.subr.bf16.mxu0 %v83
    %99 = vmatpush1.bf16.msra.mxu0 %v82
    %100 = vmatprep.subr.bf16.mxu0 %v86
    %101 = vmatpush1.bf16.msra.mxu0 %v85
    %102 = vmatprep.subr.bf16.mxu0 0
    %103 = vmatpush1.bf16.msra.mxu0 0
    %104 = vmatprep.subr.bf16.mxu0 0
    %105 = vmatpush1.bf16.msra.mxu0 0
    %106 = vmatprep.subr.bf16.mxu0 0
    %107 = vmatpush1.bf16.msra.mxu0 0
    %108 = vmatprep.subr.bf16.mxu0 0
    %109 = vmatpush1.bf16.msra.mxu0 0
    %110 = vmatprep.subr.bf16.mxu0 0
    %111 = vmatpush1.bf16.msra.mxu0 0
    %112 = vmatprep.subr.bf16.mxu0 0
    %113 = vmatpush1.bf16.msra.mxu0 0
    %114 = vmatprep.subr.bf16.mxu0 0
    %115 = vmatpush1.bf16.msra.mxu0 0
    %116 = vmatprep.subr.bf16.mxu0 0
    %117 = vmatpush1.bf16.msra.mxu0 0
    %118 = vmatprep.subr.bf16.mxu0 0
    %119 = vmatpush1.bf16.msra.mxu0 0
    %120 = vmatprep.subr.bf16.mxu0 0
    %121 = vmatpush1.bf16.msra.mxu0 0
    %122 = vmatprep.subr.bf16.mxu0 0
    %123 = vmatpush1.bf16.msra.mxu0 0
    %124 = vmatprep.subr.bf16.mxu0 0
    %125 = vmatpush1.bf16.msra.mxu0 0
    %126 = vmatprep.subr.bf16.mxu0 0
    %127 = vmatpush1.bf16.msra.mxu0 0
    %128 = vmatprep.subr.bf16.mxu0 0
    %129 = vmatpush1.bf16.msra.mxu0 0
    %130 = vmatprep.mubr.bf16.mxu0 0
    %131 = vmatmul.mubr.bf16.gmra.mrb[0].mxu0 %v96
    %v132 = vpop.f32.mrb[0].mxu0
    %v133 = vadd.f32 %v50, %v132
    %v134 = vpop.f32.mrb[0].mxu0
    %v135 = vadd.f32 %v54, %v134
    %v136 = vpop.f32.mrb[0].mxu0
    %v137 = vadd.f32 %v50, %v136
    %v138 = vpop.f32.mrb[0].mxu0
    %v139 = vadd.f32 %v54, %v138
    %140 = vdwg.mxu0
    %141 = vmatprep.subr.bf16.mxu0 0
    %142 = vmatpush1.bf16.msra.mxu0 %v84
    %143 = vmatprep.subr.bf16.mxu0 0
    %144 = vmatpush1.bf16.msra.mxu0 %v87
    %145 = vmatprep.subr.bf16.mxu0 0
    %146 = vmatpush1.bf16.msra.mxu0 0
    %147 = vmatprep.subr.bf16.mxu0 0
    %148 = vmatpush1.bf16.msra.mxu0 0
    %149 = vmatprep.subr.bf16.mxu0 0
    %150 = vmatpush1.bf16.msra.mxu0 0
    %151 = vmatprep.subr.bf16.mxu0 0
    %152 = vmatpush1.bf16.msra.mxu0 0
    %153 = vmatprep.subr.bf16.mxu0 0
    %154 = vmatpush1.bf16.msra.mxu0 0
    %155 = vmatprep.subr.bf16.mxu0 0
    %156 = vmatpush1.bf16.msra.mxu0 0
    %157 = vmatprep.subr.bf16.mxu0 0
    %158 = vmatpush1.bf16.msra.mxu0 0
    %159 = vmatprep.subr.bf16.mxu0 0
    %160 = vmatpush1.bf16.msra.mxu0 0
    %161 = vmatprep.subr.bf16.mxu0 0
    %162 = vmatpush1.bf16.msra.mxu0 0
    %163 = vmatprep.subr.bf16.mxu0 0
    %164 = vmatpush1.bf16.msra.mxu0 0
    %165 = vmatprep.subr.bf16.mxu0 0
    %166 = vmatpush1.bf16.msra.mxu0 0
    %167 = vmatprep.subr.bf16.mxu0 0
    %168 = vmatpush1.bf16.msra.mxu0 0
    %169 = vmatprep.subr.bf16.mxu0 0
    %170 = vmatpush1.bf16.msra.mxu0 0
    %171 = vmatprep.subr.bf16.mxu0 0
    %172 = vmatpush1.bf16.msra.mxu0 0
    %173 = vmatprep.mubr.bf16.mxu0 0
    %174 = vmatmul.mubr.bf16.gmra.mrb[0].mxu0 %v96
    %v175 = vpop.f32.mrb[0].mxu0
    %v176 = vadd.f32 %v58, %v175
    %v177 = vpop.f32.mrb[0].mxu0
    %v178 = vpop.f32.mrb[0].mxu0
    %v179 = vadd.f32 %v58, %v178
    %v180 = vpop.f32.mrb[0].mxu0
    %181 = vdwg.mxu0
    %v182 = vmul.f32 %v133, %v135
    %v183 = vmul.f32 %v137, %v139
    %v184 = vpack.c.bf16 %v183, %v182
    %v185 = vld [vmem:[%s3] sm:$0xf]
    %v186 = vld [vmem:[%s3 + $0x4] sm:$0xf]
    %v187 = vld [vmem:[%s3 + $0x8] sm:$0xf]
    %v188 = vld [vmem:[%s3 + $0xc] sm:$0xf]
    %v189 = vld [vmem:[%s3 + $0x10] sm:$0xf]
    %v190 = vld [vmem:[%s3 + $0x14] sm:$0xf]
    %v191 = vld [vmem:[%s3 + $0x18] sm:$0xf]
    %v192 = vld [vmem:[%s3 + $0x1c] sm:$0xf]
    %v193 = vld [vmem:[%s3 + $0x20] sm:$0xf]
    %v194 = vld [vmem:[%s3 + $0x24] sm:$0xf]
    %v195 = vld [vmem:[%s3 + $0x28] sm:$0xf]
    %v196 = vld [vmem:[%s3 + $0x2c] sm:$0xf]
    %v197 = vld [vmem:[%s3 + $0x30] sm:$0xf]
    %v198 = vld [vmem:[%s3 + $0x34] sm:$0xf]
    %v199 = vld [vmem:[%s3 + $0x38] sm:$0xf]
    %v200 = vld [vmem:[%s3 + $0x3c] sm:$0xf]
    %v217 = vunpack.c.l.b16 %v185
    %v218 = vunpack.c.l.b16 %v186
    %v219 = vunpack.c.l.b16 %v187
    %v220 = vunpack.c.l.b16 %v188
    %v221 = vunpack.c.l.b16 %v189
    %v222 = vunpack.c.l.b16 %v190
    %v223 = vunpack.c.l.b16 %v191
    %v224 = vunpack.c.l.b16 %v192
    %v225 = vunpack.c.l.b16 %v193
    %v226 = vunpack.c.l.b16 %v194
    %v227 = vunpack.c.l.b16 %v195
    %v228 = vunpack.c.l.b16 %v196
    %v229 = vunpack.c.l.b16 %v197
    %v230 = vunpack.c.l.b16 %v198
    %v231 = vunpack.c.l.b16 %v199
    %v232 = vunpack.c.l.b16 %v200
    %v233 = vpack.c.b16 %v218, %v217
    %v234 = vpack.c.b16 %v220, %v219
    %v235 = vpack.c.b16 %v222, %v221
    %v236 = vpack.c.b16 %v224, %v223
    %v237 = vpack.c.b16 %v226, %v225
    %v238 = vpack.c.b16 %v228, %v227
    %v239 = vpack.c.b16 %v230, %v229
    %v240 = vpack.c.b16 %v232, %v231
    %249 = vmatprep.subr.bf16.mxu0 0
    %250 = vmatpush1.bf16.msra.mxu0 %v233
    %251 = vmatprep.subr.bf16.mxu0 0
    %252 = vmatpush1.bf16.msra.mxu0 %v234
    %253 = vmatprep.subr.bf16.mxu0 0
    %254 = vmatpush1.bf16.msra.mxu0 %v235
    %255 = vmatprep.subr.bf16.mxu0 0
    %256 = vmatpush1.bf16.msra.mxu0 %v236
    %257 = vmatprep.subr.bf16.mxu0 0
    %258 = vmatpush1.bf16.msra.mxu0 %v237
    %259 = vmatprep.subr.bf16.mxu0 0
    %260 = vmatpush1.bf16.msra.mxu0 %v238
    %261 = vmatprep.subr.bf16.mxu0 0
    %262 = vmatpush1.bf16.msra.mxu0 %v239
    %263 = vmatprep.subr.bf16.mxu0 0
    %264 = vmatpush1.bf16.msra.mxu0 %v240
    %265 = vmatprep.subr.bf16.mxu0 0
    %266 = vmatpush1.bf16.msra.mxu0 0
    %267 = vmatprep.subr.bf16.mxu0 0
    %268 = vmatpush1.bf16.msra.mxu0 0
    %269 = vmatprep.subr.bf16.mxu0 0
    %270 = vmatpush1.bf16.msra.mxu0 0
    %271 = vmatprep.subr.bf16.mxu0 0
    %272 = vmatpush1.bf16.msra.mxu0 0
    %273 = vmatprep.subr.bf16.mxu0 0
    %274 = vmatpush1.bf16.msra.mxu0 0
    %275 = vmatprep.subr.bf16.mxu0 0
    %276 = vmatpush1.bf16.msra.mxu0 0
    %277 = vmatprep.subr.bf16.mxu0 0
    %278 = vmatpush1.bf16.msra.mxu0 0
    %279 = vmatprep.subr.bf16.mxu0 0
    %280 = vmatpush1.bf16.msra.mxu0 0
    %281 = vmatprep.mubr.bf16.mxu0 0
    %282 = vmatmul.mubr.bf16.gmra.mrb[0].mxu0 %v184
    %v283 = vpop.f32.mrb[0].mxu0
    %v284 = vadd.f32 0.0, %v283
    %v285 = vpop.f32.mrb[0].mxu0
    %v286 = vpop.f32.mrb[0].mxu0
    %v287 = vadd.f32 0.0, %v286
    %v288 = vpop.f32.mrb[0].mxu0
    %289 = vdwg.mxu0
    %vm290 = vcmask 130048
    %v291 = vsel %vm290, %v284, -inf
    %292 = vmax.xlane.f32.xlu0 %v291
    %v293 = vpop.xlane.xlu0 %292
    %v294 = vsel %vm290, %v287, -inf
    %295 = vmax.xlane.f32.xlu0 %v294
    %v296 = vpop.xlane.xlu0 %295
    %v297 = vsub.f32 %v284, %v293
    %v298 = vsub.f32 %v287, %v296
    %v299 = vmul.f32 %v297, 1.442695
    %v300 = vpow.pop %v299
    %v301 = vmul.f32 %v298, 1.442695
    %v302 = vpow.pop %v301
    %v303 = vpack.c.bf16 %v302, %v300
    %v304 = vld [vmem:[%s6] sm:$0xf]
    %v305 = vld [vmem:[%s6 + $0x4] sm:$0xf]
    %v308 = vunpack.c.l.b16 %v304
    %v309 = vunpack.c.l.b16 %v305
    %v310 = vpack.c.b16 %v309, %v308
    %v313 = vsel %vm290, %v303, 0
    %315 = vmatprep.subr.bf16.mxu0 0
    %316 = vmatpush1.bf16.msra.mxu0 %v310
    %317 = vmatprep.subr.bf16.mxu0 0
    %318 = vmatpush1.bf16.msra.mxu0 0
    %319 = vmatprep.subr.bf16.mxu0 0
    %320 = vmatpush1.bf16.msra.mxu0 0
    %321 = vmatprep.subr.bf16.mxu0 0
    %322 = vmatpush1.bf16.msra.mxu0 0
    %323 = vmatprep.subr.bf16.mxu0 0
    %324 = vmatpush1.bf16.msra.mxu0 0
    %325 = vmatprep.subr.bf16.mxu0 0
    %326 = vmatpush1.bf16.msra.mxu0 0
    %327 = vmatprep.subr.bf16.mxu0 0
    %328 = vmatpush1.bf16.msra.mxu0 0
    %329 = vmatprep.subr.bf16.mxu0 0
    %330 = vmatpush1.bf16.msra.mxu0 0
    %331 = vmatprep.subr.bf16.mxu0 0
    %332 = vmatpush1.bf16.msra.mxu0 0
    %333 = vmatprep.subr.bf16.mxu0 0
    %334 = vmatpush1.bf16.msra.mxu0 0
    %335 = vmatprep.subr.bf16.mxu0 0
    %336 = vmatpush1.bf16.msra.mxu0 0
    %337 = vmatprep.subr.bf16.mxu0 0
    %338 = vmatpush1.bf16.msra.mxu0 0
    %339 = vmatprep.subr.bf16.mxu0 0
    %340 = vmatpush1.bf16.msra.mxu0 0
    %341 = vmatprep.subr.bf16.mxu0 0
    %342 = vmatpush1.bf16.msra.mxu0 0
    %343 = vmatprep.subr.bf16.mxu0 0
    %344 = vmatpush1.bf16.msra.mxu0 0
    %345 = vmatprep.subr.bf16.mxu0 0
    %346 = vmatpush1.bf16.msra.mxu0 0
    %347 = vmatprep.mubr.bf16.mxu0 0
    %348 = vmatmul.mubr.bf16.gmra.mrb[0].mxu0 %v313
    %v349 = vpop.f32.mrb[0].mxu0
    %v350 = vadd.f32 0.0, %v349
    %v351 = vpop.f32.mrb[0].mxu0
    %v352 = vpop.f32.mrb[0].mxu0
    %v353 = vadd.f32 0.0, %v352
    %v354 = vpop.f32.mrb[0].mxu0
    %355 = vdwg.mxu0
    %v356 = vmax.f32 %v350, 1e-30
    %v357 = vmax.f32 %v353, 1e-30
    %v358 = vrcp.pop %v356
    %v359 = vrcp.pop %v357
    %v360 = vld [vmem:[%s4] sm:$0xf]
    %v361 = vld [vmem:[%s4 + $0x4] sm:$0xf]
    %v364 = vunpack.c.l.b16 %v360
    %v365 = vunpack.c.l.b16 %v361
    %v366 = vpack.c.b16 %v365, %v364
    %368 = vmatprep.subr.bf16.mxu0 0
    %369 = vmatpush1.bf16.msra.mxu0 %v366
    %370 = vmatprep.subr.bf16.mxu0 0
    %371 = vmatpush1.bf16.msra.mxu0 0
    %372 = vmatprep.subr.bf16.mxu0 0
    %373 = vmatpush1.bf16.msra.mxu0 0
    %374 = vmatprep.subr.bf16.mxu0 0
    %375 = vmatpush1.bf16.msra.mxu0 0
    %376 = vmatprep.subr.bf16.mxu0 0
    %377 = vmatpush1.bf16.msra.mxu0 0
    %378 = vmatprep.subr.bf16.mxu0 0
    %379 = vmatpush1.bf16.msra.mxu0 0
    %380 = vmatprep.subr.bf16.mxu0 0
    %381 = vmatpush1.bf16.msra.mxu0 0
    %382 = vmatprep.subr.bf16.mxu0 0
    %383 = vmatpush1.bf16.msra.mxu0 0
    %384 = vmatprep.subr.bf16.mxu0 0
    %385 = vmatpush1.bf16.msra.mxu0 0
    %386 = vmatprep.subr.bf16.mxu0 0
    %387 = vmatpush1.bf16.msra.mxu0 0
    %388 = vmatprep.subr.bf16.mxu0 0
    %389 = vmatpush1.bf16.msra.mxu0 0
    %390 = vmatprep.subr.bf16.mxu0 0
    %391 = vmatpush1.bf16.msra.mxu0 0
    %392 = vmatprep.subr.bf16.mxu0 0
    %393 = vmatpush1.bf16.msra.mxu0 0
    %394 = vmatprep.subr.bf16.mxu0 0
    %395 = vmatpush1.bf16.msra.mxu0 0
    %396 = vmatprep.subr.bf16.mxu0 0
    %397 = vmatpush1.bf16.msra.mxu0 0
    %398 = vmatprep.subr.bf16.mxu0 0
    %399 = vmatpush1.bf16.msra.mxu0 0
    %400 = vmatprep.mubr.bf16.mxu0 0
    %401 = vmatmul.mubr.bf16.gmra.mrb[0].mxu0 %v313
    %v402 = vpop.f32.mrb[0].mxu0
    %v403 = vadd.f32 0.0, %v402
    %v404 = vpop.f32.mrb[0].mxu0
    %v405 = vpop.f32.mrb[0].mxu0
    %v406 = vadd.f32 0.0, %v405
    %v407 = vpop.f32.mrb[0].mxu0
    %408 = vdwg.mxu0
    %v409 = vmul.f32 %v403, %v176
    %v410 = vmul.f32 %v406, %v179
    %v411 = vpack.c.bf16 %v410, %v409
    %v412 = vld [vmem:[%s5] sm:$0xf]
    %v413 = vld [vmem:[%s5 + $0x4] sm:$0xf]
    %v414 = vld [vmem:[%s5 + $0x8] sm:$0xf]
    %v415 = vld [vmem:[%s5 + $0xc] sm:$0xf]
    %v416 = vld [vmem:[%s5 + $0x10] sm:$0xf]
    %v417 = vld [vmem:[%s5 + $0x14] sm:$0xf]
    %v418 = vld [vmem:[%s5 + $0x18] sm:$0xf]
    %v419 = vld [vmem:[%s5 + $0x1c] sm:$0xf]
    %v420 = vld [vmem:[%s5 + $0x20] sm:$0xf]
    %v421 = vld [vmem:[%s5 + $0x24] sm:$0xf]
    %v422 = vld [vmem:[%s5 + $0x28] sm:$0xf]
    %v423 = vld [vmem:[%s5 + $0x2c] sm:$0xf]
    %v424 = vld [vmem:[%s5 + $0x30] sm:$0xf]
    %v425 = vld [vmem:[%s5 + $0x34] sm:$0xf]
    %v426 = vld [vmem:[%s5 + $0x38] sm:$0xf]
    %v427 = vld [vmem:[%s5 + $0x3c] sm:$0xf]
    %v444 = vunpack.c.l.b16 %v412
    %v445 = vunpack.c.l.b16 %v413
    %v446 = vunpack.c.l.b16 %v414
    %v447 = vunpack.c.l.b16 %v415
    %v448 = vunpack.c.l.b16 %v416
    %v449 = vunpack.c.l.b16 %v417
    %v450 = vunpack.c.l.b16 %v418
    %v451 = vunpack.c.l.b16 %v419
    %v452 = vunpack.c.l.b16 %v420
    %v453 = vunpack.c.l.b16 %v421
    %v454 = vunpack.c.l.b16 %v422
    %v455 = vunpack.c.l.b16 %v423
    %v456 = vunpack.c.l.b16 %v424
    %v457 = vunpack.c.l.b16 %v425
    %v458 = vunpack.c.l.b16 %v426
    %v459 = vunpack.c.l.b16 %v427
    %v460 = vpack.c.b16 %v445, %v444
    %v461 = vpack.c.b16 %v447, %v446
    %v462 = vpack.c.b16 %v449, %v448
    %v463 = vpack.c.b16 %v451, %v450
    %v464 = vpack.c.b16 %v453, %v452
    %v465 = vpack.c.b16 %v455, %v454
    %v466 = vpack.c.b16 %v457, %v456
    %v467 = vpack.c.b16 %v459, %v458
    %476 = vmatprep.subr.bf16.mxu0 0
    %477 = vmatpush1.bf16.msra.mxu0 %v460
    %478 = vmatprep.subr.bf16.mxu0 0
    %479 = vmatpush1.bf16.msra.mxu0 %v461
    %480 = vmatprep.subr.bf16.mxu0 0
    %481 = vmatpush1.bf16.msra.mxu0 %v462
    %482 = vmatprep.subr.bf16.mxu0 0
    %483 = vmatpush1.bf16.msra.mxu0 %v463
    %484 = vmatprep.subr.bf16.mxu0 0
    %485 = vmatpush1.bf16.msra.mxu0 %v464
    %486 = vmatprep.subr.bf16.mxu0 0
    %487 = vmatpush1.bf16.msra.mxu0 %v465
    %488 = vmatprep.subr.bf16.mxu0 0
    %489 = vmatpush1.bf16.msra.mxu0 %v466
    %490 = vmatprep.subr.bf16.mxu0 0
    %491 = vmatpush1.bf16.msra.mxu0 %v467
    %492 = vmatprep.subr.bf16.mxu0 0
    %493 = vmatpush1.bf16.msra.mxu0 0
    %494 = vmatprep.subr.bf16.mxu0 0
    %495 = vmatpush1.bf16.msra.mxu0 0
    %496 = vmatprep.subr.bf16.mxu0 0
    %497 = vmatpush1.bf16.msra.mxu0 0
    %498 = vmatprep.subr.bf16.mxu0 0
    %499 = vmatpush1.bf16.msra.mxu0 0
    %500 = vmatprep.subr.bf16.mxu0 0
    %501 = vmatpush1.bf16.msra.mxu0 0
    %502 = vmatprep.subr.bf16.mxu0 0
    %503 = vmatpush1.bf16.msra.mxu0 0
    %504 = vmatprep.subr.bf16.mxu0 0
    %505 = vmatpush1.bf16.msra.mxu0 0
    %506 = vmatprep.subr.bf16.mxu0 0
    %507 = vmatpush1.bf16.msra.mxu0 0
    %508 = vmatprep.mubr.bf16.mxu0 0
    %509 = vmatmul.mubr.bf16.gmra.mrb[0].mxu0 %v411
    %v510 = vpop.f32.mrb[0].mxu0
    %v511 = vadd.f32 0.0, %v510
    %v512 = vpop.f32.mrb[0].mxu0
    %v513 = vpop.f32.mrb[0].mxu0
    %v514 = vadd.f32 0.0, %v513
    %v515 = vpop.f32.mrb[0].mxu0
    %516 = vdwg.mxu0
    %v517 = vmul.f32 %v511, %v358
    %v518 = vmul.f32 %v514, %v359
    %v519 = vpack.c.bf16 %v518, %v517
    %v520 = vld [vmem:[%s7] sm:$0xf]
    %v521 = vld [vmem:[%s7 + $0x4] sm:$0xf]
    %v522 = vld [vmem:[%s7 + $0x8] sm:$0xf]
    %v523 = vld [vmem:[%s7 + $0xc] sm:$0xf]
    %v524 = vld [vmem:[%s8] sm:$0x1]
    %v526 = vlaneseq
    %v527 = vshrl.u32 %v526, 7
    %v528 = vsub.s32 0, %v527
    %v529 = vrot.slane %v524, %v528
    %v535 = vunpack.c.l.b16 %v520
    %v536 = vunpack.c.l.b16 %v521
    %v537 = vunpack.c.l.b16 %v522
    %v538 = vunpack.c.l.b16 %v523
    %v539 = vpack.c.b16 %v536, %v535
    %v540 = vpack.c.b16 %v538, %v537
    %v544 = vsel %vm94, %v519, 0
    %546 = vmatprep.subr.bf16.mxu0 0
    %547 = vmatpush1.bf16.msra.mxu0 %v539
    %548 = vmatprep.subr.bf16.mxu0 0
    %549 = vmatpush1.bf16.msra.mxu0 %v540
    %550 = vmatprep.subr.bf16.mxu0 0
    %551 = vmatpush1.bf16.msra.mxu0 0
    %552 = vmatprep.subr.bf16.mxu0 0
    %553 = vmatpush1.bf16.msra.mxu0 0
    %554 = vmatprep.subr.bf16.mxu0 0
    %555 = vmatpush1.bf16.msra.mxu0 0
    %556 = vmatprep.subr.bf16.mxu0 0
    %557 = vmatpush1.bf16.msra.mxu0 0
    %558 = vmatprep.subr.bf16.mxu0 0
    %559 = vmatpush1.bf16.msra.mxu0 0
    %560 = vmatprep.subr.bf16.mxu0 0
    %561 = vmatpush1.bf16.msra.mxu0 0
    %562 = vmatprep.subr.bf16.mxu0 0
    %563 = vmatpush1.bf16.msra.mxu0 0
    %564 = vmatprep.subr.bf16.mxu0 0
    %565 = vmatpush1.bf16.msra.mxu0 0
    %566 = vmatprep.subr.bf16.mxu0 0
    %567 = vmatpush1.bf16.msra.mxu0 0
    %568 = vmatprep.subr.bf16.mxu0 0
    %569 = vmatpush1.bf16.msra.mxu0 0
    %570 = vmatprep.subr.bf16.mxu0 0
    %571 = vmatpush1.bf16.msra.mxu0 0
    %572 = vmatprep.subr.bf16.mxu0 0
    %573 = vmatpush1.bf16.msra.mxu0 0
    %574 = vmatprep.subr.bf16.mxu0 0
    %575 = vmatpush1.bf16.msra.mxu0 0
    %576 = vmatprep.subr.bf16.mxu0 0
    %577 = vmatpush1.bf16.msra.mxu0 0
    %578 = vmatprep.mubr.bf16.mxu0 0
    %579 = vmatmul.mubr.bf16.gmra.mrb[0].mxu0 %v544
    %v580 = vpop.f32.mrb[0].mxu0
    %v581 = vadd.f32 %v529, %v580
    %v582 = vpop.f32.mrb[0].mxu0
    %v583 = vpop.f32.mrb[0].mxu0
    %v584 = vadd.f32 %v529, %v583
    %v585 = vpop.f32.mrb[0].mxu0
    %586 = vdwg.mxu0
    %587 = vst.msk [vmem:[#allocation2] sm:$0xff] %vm94, %v581
    %588 = vst.msk [vmem:[#allocation2 + $0x8] sm:$0xff] %vm94, %v584
    // Predicated region
    $region38: #{tpu_custom_call.1} parent=1 // pred_check
      _
    $region39: #{tpu_custom_call.1} parent=1 // pred_check_branch
      %590 = sbr.rel (0) target = $region41
    $region40: #{tpu_custom_call.1} parent=1 // pred_region
      %s592 = ssub.s32 256, 256
      %593 = vsyncadd [#allocation3], %s592
      %s594 = sshll.u32 [#allocation2], 4
      %s595 = int_to_ptr.vmem [resolvable:$true] %s594
      %600 = dma.vmem_to_hbm [thread:$0]  %s595, 256, %s9, [#allocation3], 128, 128, 8
    $region41: #{tpu_custom_call.1} parent=1 // pred_fallthru
      _
    // Predicated region
    $region42: #{tpu_custom_call.1} parent=1 // pred_check
      _
    $region43: #{tpu_custom_call.1} parent=1 // pred_check_branch
      %602 = sbr.rel (0) target = $region45
    $region44: #{tpu_custom_call.1} parent=1 // pred_region
      %603 = dma.done [#allocation3], 256
    $region45: #{tpu_custom_call.1} parent=1 // pred_fallthru
      _
    %604 = vsyncpa [#allocation3], 1

</llo_original>
